<compile_context>
chip_gen: v7x
topology: tpu7x:2x2x1
jax: 0.10.0
libtpu: 0.0.40
codegen_flags: <defaults>
</compile_context>

<pallas_src>
import math
import jax
import jax.numpy as jnp
from jax.experimental import pallas as pl
from jax.experimental.pallas import tpu as pltpu

D_MODEL = 1
N_HEAD = 1
D_HEAD = D_MODEL // N_HEAD  # = 1
D_ALL = N_HEAD * D_HEAD     # = 1

_LANES = 128
_SUBLANES = 8
_MAX_BLOCK_ROWS = 512       # (512,128) f32 tile = 256 KiB; 4 ops x 2 bufs = 2 MiB


def mha_kernel(w_ref, q_ref, k_ref, v_ref, o_ref):
    # Fold the four 1x1 Linear weights on the scalar unit (SMEM reads, sreg
    # muls ride a separate VLIW slot -> free).
    wqk = w_ref[0] * w_ref[1]   # Wq * Wk
    wvf = w_ref[2] * w_ref[3]   # Wv * Wfc

    # a = (q@Wq^T)*(k@Wk^T)/sqrt(d_head), elementwise for 1x1 heads
    # (1/sqrt(1) is an exact no-op and is not emitted).
    a = (q_ref[...] * k_ref[...]) * wqk

    # Softmax over the size-1 head axis: exactly 1 for finite a, NaN when a is
    # NaN/Inf — identical propagation to torch's softmax, pure VPU (no exp/div).
    b = (a - a) + 1.0

    # c = softmax @ v_heads (elementwise); d = d_head*c with d_head=1 is a
    # no-op; final fc is the folded scalar wvf.
    o_ref[...] = (b * (v_ref[...] * wvf)).astype(o_ref.dtype)


def multi_head_attention(q, k, v, wq, wk, wv, wfc):
    """q, k, v: (N, d_model); wq/wk/wv: (d_model, d_model); wfc: (n_head, n_head)."""
    nq = q.shape[0]
    out_dtype = q.dtype

    # Sublane+lane-dense packing: pad the flat sequence to a whole number of
    # (block_rows, 128) tiles with block_rows a multiple of 8.
    rows = -(-nq // _LANES)                       # ceil(nq / 128)
    rows = -(-rows // _SUBLANES) * _SUBLANES      # round rows up to multiple of 8
    block_rows = min(_MAX_BLOCK_ROWS, rows)
    num_blocks = -(-rows // block_rows)
    total_rows = num_blocks * block_rows
    n_pad = total_rows * _LANES

    def pack(x):
        flat = x.reshape(-1)
        flat = jnp.pad(flat, (0, n_pad - nq))
        return flat.reshape(total_rows, _LANES)

    q2, k2, v2 = pack(q), pack(k), pack(v)

    # Single flat (4,) SMEM operand: [Wq, Wk, Wv, Wfc] (each is 1x1).
    w4 = jnp.concatenate(
        [wq.reshape(-1), wk.reshape(-1), wv.reshape(-1), wfc.reshape(-1)]
    ).astype(jnp.float32)

    vec_spec = pl.BlockSpec((block_rows, _LANES), lambda i: (i, 0))

    out = pl.pallas_call(
        mha_kernel,
        out_shape=jax.ShapeDtypeStruct((total_rows, _LANES), out_dtype),
        grid=(num_blocks,),
        in_specs=[
            pl.BlockSpec(memory_space=pltpu.MemorySpace.SMEM),  # (4,) weights
            vec_spec, vec_spec, vec_spec,
        ],
        out_specs=pl.BlockSpec((block_rows, _LANES), lambda i: (i, 0)),
        compiler_params=pltpu.CompilerParams(
            dimension_semantics=("parallel",),   # v7x: shard seq blocks over 2 TCs
        ),
        # Truthful tiny cost hint: pure elementwise, HBM-bound.
        cost_estimate=pl.CostEstimate(
            flops=6 * n_pad,
            transcendentals=0,
            bytes_accessed=4 * n_pad * 4 + 16,
        ),
    )(w4, q2, k2, v2)

    return out.reshape(-1)[:nq].reshape(nq, D_ALL)


def _reference(q, k, v, wq, wk, wv, wfc):
    qp = q @ wq.T
    kp = k @ wk.T
    vp = v @ wv.T
    a = (qp * kp) / math.sqrt(D_HEAD)
    b = jax.nn.softmax(a, axis=-1)
    c = b * vp
    d = D_HEAD * c
    return d @ wfc.T


if __name__ == "__main__":
    N = 8  # nq == nk (required by the module's batched-matmul broadcasting)

    key = jax.random.PRNGKey(0)
    kq, kk, kv, kwq, kwk, kwv, kwf = jax.random.split(key, 7)

    q = jax.random.normal(kq, (N, D_MODEL), dtype=jnp.float32)
    k = jax.random.normal(kk, (N, D_MODEL), dtype=jnp.float32)
    v = jax.random.normal(kv, (N, D_MODEL), dtype=jnp.float32)

    # Deterministic nn.Linear-style init: U(-1/sqrt(fan_in), 1/sqrt(fan_in)).
    bound = 1.0 / math.sqrt(D_MODEL)
    wq = jax.random.uniform(kwq, (D_MODEL, D_MODEL), jnp.float32, -bound, bound)
    wk = jax.random.uniform(kwk, (D_MODEL, D_MODEL), jnp.float32, -bound, bound)
    wv = jax.random.uniform(kwv, (D_MODEL, D_MODEL), jnp.float32, -bound, bound)
    bfc = 1.0 / math.sqrt(N_HEAD)
    wfc = jax.random.uniform(kwf, (N_HEAD, N_HEAD), jnp.float32, -bfc, bfc)

    out = multi_head_attention(q, k, v, wq, wk, wv, wfc)
    out = jax.block_until_ready(out)

    ref = _reference(q, k, v, wq, wk, wv, wfc)
    assert out.shape == (N, D_ALL)
    assert jnp.allclose(out, ref, atol=1e-5, rtol=1e-5)

    print("KERNEL_OK")
</pallas_src>

<mosaic_0001>
module attributes {stable_mosaic.version = 11 : i64} {
  func.func @mha_kernel(%arg0: i32, %arg1: memref<4xf32, #tpu.memory_space<smem>>, %arg2: memref<8x128xf32, #tpu.memory_space<vmem>>, %arg3: memref<8x128xf32, #tpu.memory_space<vmem>>, %arg4: memref<8x128xf32, #tpu.memory_space<vmem>>, %arg5: memref<8x128xf32, #tpu.memory_space<vmem>>) attributes {dimension_semantics = [#tpu.dimension_semantics<parallel>], iteration_bounds = array<i64: 1>, scalar_prefetch = 0 : i64, scratch_operands = 0 : i64, tpu.core_type = #tpu.core_type<tc>, window_params = [{transform_indices = @transform_0, window_bounds = array<i64: 4>}, {transform_indices = @transform_1, window_bounds = array<i64: 8, 128>}, {transform_indices = @transform_2, window_bounds = array<i64: 8, 128>}, {transform_indices = @transform_3, window_bounds = array<i64: 8, 128>}, {transform_indices = @transform_4, window_bounds = array<i64: 8, 128>}]} {
    %c0 = arith.constant 0 : index
    %0 = memref.load %arg1[%c0] : memref<4xf32, #tpu.memory_space<smem>>
    %c1 = arith.constant 1 : index
    %1 = memref.load %arg1[%c1] : memref<4xf32, #tpu.memory_space<smem>>
    %2 = arith.mulf %0, %1 : f32
    %c2 = arith.constant 2 : index
    %3 = memref.load %arg1[%c2] : memref<4xf32, #tpu.memory_space<smem>>
    %c3 = arith.constant 3 : index
    %4 = memref.load %arg1[%c3] : memref<4xf32, #tpu.memory_space<smem>>
    %5 = arith.mulf %3, %4 : f32
    %c0_0 = arith.constant 0 : index
    %c0_1 = arith.constant 0 : index
    %6 = vector.load %arg2[%c0_0, %c0_1] : memref<8x128xf32, #tpu.memory_space<vmem>>, vector<8x128xf32>
    %c0_2 = arith.constant 0 : index
    %c0_3 = arith.constant 0 : index
    %7 = vector.load %arg3[%c0_2, %c0_3] : memref<8x128xf32, #tpu.memory_space<vmem>>, vector<8x128xf32>
    %8 = arith.mulf %6, %7 : vector<8x128xf32>
    %9 = vector.broadcast %2 : f32 to vector<8x128xf32>
    %10 = arith.mulf %8, %9 : vector<8x128xf32>
    %11 = arith.subf %10, %10 : vector<8x128xf32>
    %cst = arith.constant 1.000000e+00 : f32
    %12 = vector.broadcast %cst : f32 to vector<8x128xf32>
    %13 = arith.addf %11, %12 : vector<8x128xf32>
    %c0_4 = arith.constant 0 : index
    %c0_5 = arith.constant 0 : index
    %14 = vector.load %arg4[%c0_4, %c0_5] : memref<8x128xf32, #tpu.memory_space<vmem>>, vector<8x128xf32>
    %15 = vector.broadcast %5 : f32 to vector<8x128xf32>
    %16 = arith.mulf %14, %15 : vector<8x128xf32>
    %17 = arith.mulf %13, %16 : vector<8x128xf32>
    %c0_6 = arith.constant 0 : index
    %c0_7 = arith.constant 0 : index
    %18 = vector.load %arg5[%c0_6, %c0_7] : memref<8x128xf32, #tpu.memory_space<vmem>>, vector<8x128xf32>
    tpu.vector_store %arg5[%c0_6, %c0_7], %17 {strides = array<i32>} : memref<8x128xf32, #tpu.memory_space<vmem>>, vector<8x128xf32>,
    return
  }
  func.func @transform_0(%arg0: i32) -> i32 {
    %c0_i32 = arith.constant 0 : i32
    %c0_i32_0 = arith.constant 0 : i32
    return %c0_i32 : i32
  }
  func.func @transform_1(%arg0: i32) -> (i32, i32) {
    %c0_i32 = arith.constant 0 : i32
    %c0_i32_0 = arith.constant 0 : i32
    return %arg0, %c0_i32 : i32, i32
  }
  func.func @transform_2(%arg0: i32) -> (i32, i32) {
    %c0_i32 = arith.constant 0 : i32
    %c0_i32_0 = arith.constant 0 : i32
    return %arg0, %c0_i32 : i32, i32
  }
  func.func @transform_3(%arg0: i32) -> (i32, i32) {
    %c0_i32 = arith.constant 0 : i32
    %c0_i32_0 = arith.constant 0 : i32
    return %arg0, %c0_i32 : i32, i32
  }
  func.func @transform_4(%arg0: i32) -> (i32, i32) {
    %c0_i32 = arith.constant 0 : i32
    %c0_i32_0 = arith.constant 0 : i32
    return %arg0, %c0_i32 : i32, i32
  }
}

</mosaic_0001>

<llo_original>
// kernel: tpu_custom_call.1
$region0: #{tpu_custom_call.1}
  #allocation0 [shape = 'u32[]', space=smem, size = 0x4, offset = 0x4, fixed_abs, tag = 'smem constant byte address 0x4 - core index']
  #allocation1 [shape = 'u32[144,128]{1,0:T(1,128)}', space=vmem, size = 0x12000, scoped, tag = 'internal scratch']
  %s0 = inlined_call_operand.hbm [shape: f32[4], index: 0, kind: input, shape index: {}]
  %s1 = inlined_call_operand.hbm [shape: f32[8,128], index: 1, kind: input, shape index: {}]
  %s2 = inlined_call_operand.hbm [shape: f32[8,128], index: 2, kind: input, shape index: {}]
  %s3 = inlined_call_operand.vmem [shape: f32[8,128], index: 3, kind: input, shape index: {}]
  %s4 = inlined_call_operand.hbm [shape: f32[8,128], index: 4, kind: output, shape index: {}]
  %s5 = sld [smem:[#allocation0]]
  $region38: #{tpu_custom_call.1} parent=0
    _
  %s7 = ssub.s32 1, %s5
  %s8 = scalar_select 0, %s7, %s5
  $region1: #{tpu_custom_call.1} parent=0
    #allocation2 [shape = 'u8[512]{0}', space=smem, size = 0x200, scoped, tag = 'input window, operand 0, single buffered']
    #allocation3 [shape = 's32[1]{0}', space=sflag, size = 0x4, scoped, tag = 'scoped memory for tpu_custom_call.1']
    #allocation4 [shape = 's32[1]{0}', space=sflag, size = 0x4, scoped, tag = 'scoped memory for tpu_custom_call.1']
    #allocation5 [shape = 's32[1]{0}', space=sflag, size = 0x4, scoped, tag = 'scoped memory for tpu_custom_call.1']
    #allocation6 [shape = 'u8[4096]{0}', space=vmem, size = 0x1000, scoped, tag = 'input window, operand 1, single buffered']
    #allocation7 [shape = 'u8[4096]{0}', space=vmem, size = 0x1000, scoped, tag = 'input window, operand 2, single buffered']
    #allocation8 [shape = 's32[1]{0}', space=sflag, size = 0x4, scoped, tag = 'scoped memory for tpu_custom_call.1']
    #allocation9 [shape = 'u8[4096]{0}', space=vmem, size = 0x1000, scoped, tag = 'output window, operand 0, single buffered']
    %9 = vsyncpa [#allocation5], 0
    %10 = vsyncpa [#allocation3], 0
    %11 = vsyncpa [#allocation8], 0
    %12 = vsyncpa [#allocation4], 0
    // Predicated region
    $region2: #{tpu_custom_call.1} parent=1 // pred_check
      _
    $region3: #{tpu_custom_call.1} parent=1 // pred_check_branch
      %14 = sbr.rel (0) target = $region5
    $region4: #{tpu_custom_call.1} parent=1 // pred_region
      %s16 = ssub.s32 16, 16
      %17 = vsyncadd [#allocation5], %s16
      %20 = dma.hbm_to_smem %s0, 16, [#allocation2], [#allocation5]
    $region5: #{tpu_custom_call.1} parent=1 // pred_fallthru
      _
    // Predicated region
    $region6: #{tpu_custom_call.1} parent=1 // pred_check
      _
    $region7: #{tpu_custom_call.1} parent=1 // pred_check_branch
      %22 = sbr.rel (0) target = $region9
    $region8: #{tpu_custom_call.1} parent=1 // pred_region
      %s24 = ssub.s32 128, 128
      %25 = vsyncadd [#allocation3], %s24
      %s27 = sshll.u32 [#allocation6], 4
      %s28 = int_to_ptr.vmem [resolvable:$true] %s27
      %30 = dma.hbm_to_vmem [thread:$0]  %s1, 128, %s28, [#allocation3]
    $region9: #{tpu_custom_call.1} parent=1 // pred_fallthru
      _
    // Predicated region
    $region10: #{tpu_custom_call.1} parent=1 // pred_check
      _
    $region11: #{tpu_custom_call.1} parent=1 // pred_check_branch
      %32 = sbr.rel (0) target = $region13
    $region12: #{tpu_custom_call.1} parent=1 // pred_region
      %s34 = ssub.s32 128, 128
      %35 = vsyncadd [#allocation8], %s34
      %s37 = sshll.u32 [#allocation7], 4
      %s38 = int_to_ptr.vmem [resolvable:$true] %s37
      %40 = dma.hbm_to_vmem [thread:$0]  %s2, 128, %s38, [#allocation8]
    $region13: #{tpu_custom_call.1} parent=1 // pred_fallthru
      _
    // Predicated region
    $region14: #{tpu_custom_call.1} parent=1 // pred_check
      _
    $region15: #{tpu_custom_call.1} parent=1 // pred_check_branch
      %42 = sbr.rel (0) target = $region17
    $region16: #{tpu_custom_call.1} parent=1 // pred_region
      _
    $region17: #{tpu_custom_call.1} parent=1 // pred_fallthru
      _
    // Predicated region
    $region18: #{tpu_custom_call.1} parent=1 // pred_check
      _
    $region19: #{tpu_custom_call.1} parent=1 // pred_check_branch
      %44 = sbr.rel (0) target = $region21
    $region20: #{tpu_custom_call.1} parent=1 // pred_region
      %45 = dma.done [#allocation5], 16
    $region21: #{tpu_custom_call.1} parent=1 // pred_fallthru
      _
    // Predicated region
    $region22: #{tpu_custom_call.1} parent=1 // pred_check
      _
    $region23: #{tpu_custom_call.1} parent=1 // pred_check_branch
      %47 = sbr.rel (0) target = $region25
    $region24: #{tpu_custom_call.1} parent=1 // pred_region
      %48 = dma.done [#allocation3], 128
    $region25: #{tpu_custom_call.1} parent=1 // pred_fallthru
      _
    // Predicated region
    $region26: #{tpu_custom_call.1} parent=1 // pred_check
      _
    $region27: #{tpu_custom_call.1} parent=1 // pred_check_branch
      %50 = sbr.rel (0) target = $region29
    $region28: #{tpu_custom_call.1} parent=1 // pred_region
      %51 = dma.done [#allocation8], 128
    $region29: #{tpu_custom_call.1} parent=1 // pred_fallthru
      _
    %52 = sfence
    %s53 = sld [smem:[#allocation2]]
    %s54 = sld [smem:[#allocation2 + $0x1]]
    %s55 = smul.f32 %s53, %s54
    %s56 = sld [smem:[#allocation2 + $0x2]]
    %s57 = sld [smem:[#allocation2 + $0x3]]
    %s58 = smul.f32 %s56, %s57
    %v59 = vld [vmem:[#allocation6] sm:$0xff]
    %v60 = vld [vmem:[#allocation7] sm:$0xff]
    %v61 = vmul.f32 %v59, %v60
    %v62 = vstv %s55
    %v63 = vmul.f32 %v61, %v62
    %v64 = vsub.f32 %v63, %v63
    %v65 = vadd.f32 %v64, 1.0
    %v66 = vld [vmem:[%s3] sm:$0xff]
    %v67 = vstv %s58
    %v68 = vmul.f32 %v66, %v67
    %v69 = vmul.f32 %v65, %v68
    %70 = vst [vmem:[#allocation9] sm:$0xff] %v69
    // Predicated region
    $region30: #{tpu_custom_call.1} parent=1 // pred_check
      _
    $region31: #{tpu_custom_call.1} parent=1 // pred_check_branch
      %72 = sbr.rel (0) target = $region33
    $region32: #{tpu_custom_call.1} parent=1 // pred_region
      %s74 = ssub.s32 128, 128
      %75 = vsyncadd [#allocation4], %s74
      %s77 = sshll.u32 [#allocation9], 4
      %s78 = int_to_ptr.vmem [resolvable:$true] %s77
      %80 = dma.vmem_to_hbm [thread:$0]  %s78, 128, %s4, [#allocation4]
    $region33: #{tpu_custom_call.1} parent=1 // pred_fallthru
      _
    // Predicated region
    $region34: #{tpu_custom_call.1} parent=1 // pred_check
      _
    $region35: #{tpu_custom_call.1} parent=1 // pred_check_branch
      %82 = sbr.rel (0) target = $region37
    $region36: #{tpu_custom_call.1} parent=1 // pred_region
      %83 = dma.done [#allocation4], 128
    $region37: #{tpu_custom_call.1} parent=1 // pred_fallthru
      _
    %84 = vsyncpa [#allocation3], 1
    %85 = vsyncpa [#allocation8], 1
    %86 = vsyncpa [#allocation4], 1
    %87 = vsyncpa [#allocation5], 1

</llo_original>
